<compile_context>
chip_gen: v6e
topology: v6e:2x2x1
jax: 0.10.0
libtpu: 0.0.40
codegen_flags: <defaults>
</compile_context>

<pallas_src>
import jax
import jax.numpy as jnp
from jax.experimental import pallas as pl
from jax.experimental.pallas import tpu as pltpu

LANE = 128
SUBLANE = 8


def _tensorcores_per_chip():
    """2 on v7x (two TensorCores / chip), 1 on v5e/v6e.  Conservative fallback: 1."""
    try:
        info = pltpu.get_tpu_info()
        for attr in ("num_tensorcores", "tensorcores_per_chip", "num_cores"):
            v = getattr(info, attr, None)
            if isinstance(v, int) and v > 0:
                return min(v, 2)
    except Exception:
        pass
    try:
        if "v7" in jax.devices()[0].device_kind.lower():
            return 2
    except Exception:
        pass
    return 1


def _make_focal_bce_kernel(block_rows, tiles_per_split, valid_rows, needs_row_mask):
    groups = block_rows // SUBLANE

    def kernel(x_ref, t_ref, out_ref, acc_ref):
        i = pl.program_id(0)  # split (TensorCore) index
        j = pl.program_id(1)  # reduction step within the split

        @pl.when(j == 0)
        def _():
            acc_ref[...] = jnp.zeros_like(acc_ref)

        x = x_ref[...].astype(jnp.float32)
        t = t_ref[...].astype(jnp.float32)

        # Numerically-stable BCE-with-logits (matches torch.nn.BCEWithLogitsLoss):
        #   max(x, 0) - x*t + log(1 + exp(-|x|))
        bce = jnp.maximum(x, 0.0) - x * t + jnp.log1p(jnp.exp(-jnp.abs(x)))

        if needs_row_mask:
            # Rows past the valid slab (partial edge block / excess grid tiles)
            # hold undefined VMEM contents -> select them to 0 (NaN-safe).
            row = ((i * tiles_per_split + j) * block_rows
                   + jax.lax.broadcasted_iota(jnp.int32, (block_rows, LANE), 0))
            bce = jnp.where(row < valid_rows, bce, 0.0)

        # Fold (block_rows, LANE) into an (8, LANE) accumulator: pure elementwise
        # vreg adds (1 add/element), no cross-lane work per step, and the
        # accumulator RMW touches a single vreg instead of the whole tile.
        acc_ref[...] += bce.reshape(groups, SUBLANE, LANE).sum(axis=0)

        @pl.when(j == pl.num_programs(1) - 1)
        def _():
            # Sublane reduce only -> lane-dense (1, 128) partial row per split.
            # The final 128-lane reduce happens in the tiny JAX epilogue.
            out_ref[...] = jnp.sum(acc_ref[...], axis=0, keepdims=True)

    return kernel


def focal_loss(inputs, targets, alpha=2.0, gamma=0.8,
               block_rows=4096, num_splits=None):
    """Pallas-TPU FocalLoss forward.  Returns a scalar float32."""
    assert inputs.shape == targets.shape
    n = inputs.size

    # Native dtype passthrough (f32 cast happens in-kernel) so bf16 callers only
    # move half the HBM bytes.
    x = inputs.reshape(-1)
    t = targets.reshape(-1)

    # Minimum sublane multiple for the block's row dim (8 f32 / 16 bf16 / 32 8-bit),
    # taken over both input dtypes.
    def _sub_mult(dt):
        return SUBLANE * max(1, 4 // jnp.dtype(dt).itemsize)
    sub_mult = max(_sub_mult(inputs.dtype), _sub_mult(targets.dtype))

    rows = pl.cdiv(n, LANE)
    # Slab row count: at least one full sublane tile so block_rows <= slab_rows.
    slab_rows = max(rows, sub_mult)
    pad = slab_rows * LANE - n
    if pad:
        # Only the ragged tail (or a tiny input) gets padded — never the full
        # slab.  -1e4 logits / 0 targets contribute exactly 0 to the BCE sum
        # (max(x,0)=0, -x*t=0, log1p(exp(-1e4))=0).
        x = jnp.pad(x, (0, pad), constant_values=-1e4)
        t = jnp.pad(t, (0, pad), constant_values=0)
    x2 = x.reshape(slab_rows, LANE)
    t2 = t.reshape(slab_rows, LANE)

    # One split per TensorCore (2 on v7x, 1 on v5e/v6e) unless overridden.
    if num_splits is None:
        num_splits = _tensorcores_per_chip()

    # Big streaming tiles (>=1 MiB/stream plateaus ~85% of HBM roofline), capped
    # to what the slab actually needs and rounded to the dtype sublane multiple.
    block_rows = max(sub_mult,
                     min((block_rows // sub_mult) * sub_mult,
                         (slab_rows // sub_mult) * sub_mult))

    tiles = pl.cdiv(slab_rows, block_rows)
    num_splits = max(1, min(num_splits, tiles))
    tiles_per_split = pl.cdiv(tiles, num_splits)
    grid_rows = num_splits * tiles_per_split * block_rows
    needs_row_mask = grid_rows > slab_rows  # partial edge block / excess tiles

    tile_spec = pl.BlockSpec((block_rows, LANE),
                             lambda i, j: (i * tiles_per_split + j, 0))

    kernel = _make_focal_bce_kernel(block_rows, tiles_per_split,
                                    slab_rows, needs_row_mask)

    cost = pl.CostEstimate(
        flops=6 * n,
        transcendentals=2 * n,
        bytes_accessed=x2.nbytes + t2.nbytes + num_splits * LANE * 4,
    )

    partial = pl.pallas_call(
        kernel,
        out_shape=jax.ShapeDtypeStruct((num_splits, LANE), jnp.float32),
        grid_spec=pltpu.PrefetchScalarGridSpec(
            num_scalar_prefetch=0,
            grid=(num_splits, tiles_per_split),
            in_specs=[tile_spec, tile_spec],
            out_specs=pl.BlockSpec((1, LANE), lambda i, j: (i, 0)),
            scratch_shapes=[pltpu.VMEM((SUBLANE, LANE), jnp.float32)],
        ),
        # TODO(synk): on v7x, verify via xprof that the leading "parallel" axis
        # actually shards the two splits across TensorCores; if not, switch to
        # pltpu.CORE_PARALLEL / pl.core_map.
        compiler_params=pltpu.CompilerParams(
            dimension_semantics=("parallel", "arbitrary")),
        cost_estimate=cost,
    )(x2, t2)

    # Tiny scalar epilogue in JAX (per-split lane-dense partials -> mean -> focal).
    mean_bce = jnp.sum(partial) / jnp.float32(n)
    # Clamp guards against mean_bce rounding slightly negative (ref would NaN).
    base = jnp.maximum(1.0 - jnp.exp(-mean_bce), 0.0)
    return alpha * base ** gamma * mean_bce


def _ref_focal_loss(inputs, targets, alpha=2.0, gamma=0.8):
    x = inputs.astype(jnp.float32)
    t = targets.astype(jnp.float32)
    bce = jnp.mean(jnp.maximum(x, 0.0) - x * t + jnp.log1p(jnp.exp(-jnp.abs(x))))
    return alpha * (1.0 - jnp.exp(-bce)) ** gamma * bce


if __name__ == "__main__":
    key = jax.random.PRNGKey(0)
    k1, k2, k3, k4 = jax.random.split(key, 4)

    # Small shapes consistent with an NCHW logits map + binary targets.
    shape = (2, 4, 16, 16)
    inputs = jax.random.normal(k1, shape, dtype=jnp.float32)
    targets = jax.random.bernoulli(k2, 0.5, shape).astype(jnp.float32)

    out = focal_loss(inputs, targets, alpha=2.0, gamma=0.8)
    out = jax.block_until_ready(out)
    ref = _ref_focal_loss(inputs, targets, alpha=2.0, gamma=0.8)
    assert jnp.allclose(out, ref, rtol=1e-5, atol=1e-6), (out, ref)

    # Ragged element count (n % 128 != 0) exercises the tail-pad + row-mask path.
    shape2 = (3, 5, 7, 11)
    inputs2 = jax.random.normal(k3, shape2, dtype=jnp.float32)
    targets2 = jax.random.bernoulli(k4, 0.5, shape2).astype(jnp.float32)
    out2 = jax.block_until_ready(focal_loss(inputs2, targets2))
    ref2 = _ref_focal_loss(inputs2, targets2)
    assert jnp.allclose(out2, ref2, rtol=1e-5, atol=1e-6), (out2, ref2)

    print("KERNEL_OK")
</pallas_src>

<mosaic_0001>
module attributes {stable_mosaic.version = 11 : i64} {
  func.func @kernel(%arg0: i32, %arg1: i32, %arg2: memref<16x128xf32, #tpu.memory_space<vmem>>, %arg3: memref<16x128xf32, #tpu.memory_space<vmem>>, %arg4: memref<1x128xf32, #tpu.memory_space<vmem>>, %arg5: memref<8x128xf32, #tpu.memory_space<vmem>>) attributes {dimension_semantics = [#tpu.dimension_semantics<parallel>, #tpu.dimension_semantics<arbitrary>], iteration_bounds = array<i64: 1, 1>, scalar_prefetch = 0 : i64, scratch_operands = 1 : i64, tpu.core_type = #tpu.core_type<tc>, window_params = [{transform_indices = @transform_0, window_bounds = array<i64: 16, 128>}, {transform_indices = @transform_1, window_bounds = array<i64: 16, 128>}, {transform_indices = @transform_2, window_bounds = array<i64: 1, 128>}]} {
    %c0_i32 = arith.constant 0 : i32
    %0 = arith.cmpi eq, %arg1, %c0_i32 : i32
    %1 = arith.extui %0 : i1 to i32
    %c0_i32_0 = arith.constant 0 : i32
    %2 = arith.cmpi ne, %1, %c0_i32_0 : i32
    scf.if %2 {
      %cst_12 = arith.constant 0.000000e+00 : f32
      %23 = vector.broadcast %cst_12 : f32 to vector<8x128xf32>
      %c0_13 = arith.constant 0 : index
      %c0_14 = arith.constant 0 : index
      %24 = vector.load %arg5[%c0_13, %c0_14] : memref<8x128xf32, #tpu.memory_space<vmem>>, vector<8x128xf32>
      tpu.vector_store %arg5[%c0_13, %c0_14], %23 {strides = array<i32>} : memref<8x128xf32, #tpu.memory_space<vmem>>, vector<8x128xf32>,
    } else {
    }
    %c0 = arith.constant 0 : index
    %c0_1 = arith.constant 0 : index
    %3 = vector.load %arg2[%c0, %c0_1] : memref<16x128xf32, #tpu.memory_space<vmem>>, vector<16x128xf32>
    %c0_2 = arith.constant 0 : index
    %c0_3 = arith.constant 0 : index
    %4 = vector.load %arg3[%c0_2, %c0_3] : memref<16x128xf32, #tpu.memory_space<vmem>>, vector<16x128xf32>
    %cst = arith.constant 0.000000e+00 : f32
    %5 = vector.broadcast %cst : f32 to vector<16x128xf32>
    %6 = arith.maximumf %3, %5 : vector<16x128xf32>
    %7 = arith.mulf %3, %4 : vector<16x128xf32>
    %8 = arith.subf %6, %7 : vector<16x128xf32>
    %9 = math.absf %3 : vector<16x128xf32>
    %cst_4 = arith.constant 0.000000e+00 : f32
    %10 = vector.broadcast %cst_4 : f32 to vector<16x128xf32>
    %11 = arith.subf %10, %9 : vector<16x128xf32>
    %12 = math.exp %11 : vector<16x128xf32>
    %13 = math.log1p %12 : vector<16x128xf32>
    %14 = arith.addf %8, %13 : vector<16x128xf32>
    %c0_5 = arith.constant 0 : index
    %c0_6 = arith.constant 0 : index
    %15 = vector.load %arg5[%c0_5, %c0_6] : memref<8x128xf32, #tpu.memory_space<vmem>>, vector<8x128xf32>
    %16 = vector.shape_cast %14 : vector<16x128xf32> to vector<2x8x128xf32>
    %cst_7 = arith.constant dense<0.000000e+00> : vector<8x128xf32>
    %17 = vector.multi_reduction <add>, %16, %cst_7 [0] : vector<2x8x128xf32> to vector<8x128xf32>
    %18 = arith.addf %15, %17 : vector<8x128xf32>
    %c0_8 = arith.constant 0 : index
    %c0_9 = arith.constant 0 : index
    %19 = vector.load %arg5[%c0_8, %c0_9] : memref<8x128xf32, #tpu.memory_space<vmem>>, vector<8x128xf32>
    tpu.vector_store %arg5[%c0_8, %c0_9], %18 {strides = array<i32>} : memref<8x128xf32, #tpu.memory_space<vmem>>, vector<8x128xf32>,
    %c0_i32_10 = arith.constant 0 : i32
    %20 = arith.cmpi eq, %arg1, %c0_i32_10 : i32
    %21 = arith.extui %20 : i1 to i32
    %c0_i32_11 = arith.constant 0 : i32
    %22 = arith.cmpi ne, %21, %c0_i32_11 : i32
    scf.if %22 {
      %c0_12 = arith.constant 0 : index
      %c0_13 = arith.constant 0 : index
      %23 = vector.load %arg5[%c0_12, %c0_13] : memref<8x128xf32, #tpu.memory_space<vmem>>, vector<8x128xf32>
      %cst_14 = arith.constant dense<0.000000e+00> : vector<128xf32>
      %24 = vector.multi_reduction <add>, %23, %cst_14 [0] : vector<8x128xf32> to vector<128xf32>
      %25 = vector.shape_cast %24 : vector<128xf32> to vector<1x128xf32>
      %c0_15 = arith.constant 0 : index
      %c0_16 = arith.constant 0 : index
      %26 = vector.load %arg4[%c0_15, %c0_16] : memref<1x128xf32, #tpu.memory_space<vmem>>, vector<1x128xf32>
      tpu.vector_store %arg4[%c0_15, %c0_16], %25 {strides = array<i32>} : memref<1x128xf32, #tpu.memory_space<vmem>>, vector<1x128xf32>,
    } else {
    }
    return
  }
  func.func @transform_0(%arg0: i32, %arg1: i32) -> (i32, i32) {
    %c1_i32 = arith.constant 1 : i32
    %0 = arith.muli %arg0, %c1_i32 : i32
    %1 = arith.addi %0, %arg1 : i32
    %c0_i32 = arith.constant 0 : i32
    %c0_i32_0 = arith.constant 0 : i32
    return %1, %c0_i32 : i32, i32
  }
  func.func @transform_1(%arg0: i32, %arg1: i32) -> (i32, i32) {
    %c1_i32 = arith.constant 1 : i32
    %0 = arith.muli %arg0, %c1_i32 : i32
    %1 = arith.addi %0, %arg1 : i32
    %c0_i32 = arith.constant 0 : i32
    %c0_i32_0 = arith.constant 0 : i32
    return %1, %c0_i32 : i32, i32
  }
  func.func @transform_2(%arg0: i32, %arg1: i32) -> (i32, i32) {
    %c0_i32 = arith.constant 0 : i32
    %c0_i32_0 = arith.constant 0 : i32
    return %arg0, %c0_i32 : i32, i32
  }
}

</mosaic_0001>

<llo_original>
// kernel: tpu_custom_call.1
$region0: #{tpu_custom_call.1}
  #allocation0 [shape = 'u32[]', space=smem, size = 0x4, offset = 0x4, fixed_abs, tag = 'smem constant byte address 0x4 - core index']
  #allocation1 [shape = 'u32[144,128]{1,0:T(1,128)}', space=vmem, size = 0x12000, scoped, tag = 'internal scratch']
  #allocation2 [shape = 'f32[8,128]{1,0:T(8,128)}', space=vmem, size = 0x1000, scoped, tag = 'scratch operand']
  %s0 = inlined_call_operand.hbm [shape: f32[16,128], index: 0, kind: input, shape index: {}]
  %s1 = inlined_call_operand.hbm [shape: f32[16,128], index: 1, kind: input, shape index: {}]
  %s2 = inlined_call_operand.hbm [shape: f32[1,128], index: 2, kind: output, shape index: {}]
  %s3 = sld [smem:[#allocation0]]
  $region34: #{tpu_custom_call.1} parent=0
    _
  %s5 = ssub.s32 1, %s3
  %s6 = scalar_select 0, %s5, %s3
  $region1: #{tpu_custom_call.1} parent=0
    #allocation3 [shape = 'u8[8192]{0}', space=vmem, size = 0x2000, scoped, tag = 'input window, operand 0, single buffered']
    #allocation4 [shape = 's32[1]{0}', space=sflag, size = 0x4, scoped, tag = 'scoped memory for tpu_custom_call.1']
    #allocation5 [shape = 's32[1]{0}', space=sflag, size = 0x4, scoped, tag = 'scoped memory for tpu_custom_call.1']
    #allocation6 [shape = 'u8[8192]{0}', space=vmem, size = 0x2000, scoped, tag = 'input window, operand 1, single buffered']
    #allocation7 [shape = 's32[1]{0}', space=sflag, size = 0x4, scoped, tag = 'scoped memory for tpu_custom_call.1']
    #allocation8 [shape = 'u8[512]{0}', space=vmem, size = 0x400, scoped, tag = 'output window, operand 0, single buffered']
    %7 = vsyncpa [#allocation4], 0
    %8 = vsyncpa [#allocation7], 0
    %9 = vsyncpa [#allocation5], 0
    // Predicated region
    $region2: #{tpu_custom_call.1} parent=1 // pred_check
      _
    $region3: #{tpu_custom_call.1} parent=1 // pred_check_branch
      %11 = sbr.rel (0) target = $region5
    $region4: #{tpu_custom_call.1} parent=1 // pred_region
      %s12 = sadd.s32 0, 0
      %s13 = smul.u32 2, %s12
      %s15 = ssub.s32 256, 256
      %16 = vsyncadd [#allocation4], %s15
      %s17 = smul.addr %s13, 128
      %s18 = scalar_lea.hbm %s0, %s17
      %s19 = sshll.u32 [#allocation3], 4
      %s20 = int_to_ptr.vmem [resolvable:$true] %s19
      %25 = dma.hbm_to_vmem [thread:$0]  %s18, 256, %s20, [#allocation4], 128, 128, 8
    $region5: #{tpu_custom_call.1} parent=1 // pred_fallthru
      _
    // Predicated region
    $region6: #{tpu_custom_call.1} parent=1 // pred_check
      _
    $region7: #{tpu_custom_call.1} parent=1 // pred_check_branch
      %27 = sbr.rel (0) target = $region9
    $region8: #{tpu_custom_call.1} parent=1 // pred_region
      %s28 = sadd.s32 0, 0
      %s29 = smul.u32 2, %s28
      %s31 = ssub.s32 256, 256
      %32 = vsyncadd [#allocation7], %s31
      %s33 = smul.addr %s29, 128
      %s34 = scalar_lea.hbm %s1, %s33
      %s35 = sshll.u32 [#allocation6], 4
      %s36 = int_to_ptr.vmem [resolvable:$true] %s35
      %41 = dma.hbm_to_vmem [thread:$0]  %s34, 256, %s36, [#allocation7], 128, 128, 8
    $region9: #{tpu_custom_call.1} parent=1 // pred_fallthru
      _
    // Predicated region
    $region10: #{tpu_custom_call.1} parent=1 // pred_check
      _
    $region11: #{tpu_custom_call.1} parent=1 // pred_check_branch
      %43 = sbr.rel (0) target = $region13
    $region12: #{tpu_custom_call.1} parent=1 // pred_region
      %44 = dma.done [#allocation4], 256
    $region13: #{tpu_custom_call.1} parent=1 // pred_fallthru
      _
    // Predicated region
    $region14: #{tpu_custom_call.1} parent=1 // pred_check
      _
    $region15: #{tpu_custom_call.1} parent=1 // pred_check_branch
      %46 = sbr.rel (0) target = $region17
    $region16: #{tpu_custom_call.1} parent=1 // pred_region
      %47 = dma.done [#allocation7], 256
    $region17: #{tpu_custom_call.1} parent=1 // pred_fallthru
      _
    %s48 = sadd.s32 0, 0
    %s49 = smul.u32 2, %s48
    %s50 = sadd.s32 0, 0
    %s51 = smul.u32 2, %s50
    %p52 = scmp.eq.s32.totalorder 0, 0
    // Predicated region
    $region18: #{tpu_custom_call.1} parent=1 // pred_check
      %p53 = pneg %p52
    $region19: #{tpu_custom_call.1} parent=1 // pred_check_branch
      %55 = sbr.rel (%p53) target = $region21
    $region20: #{tpu_custom_call.1} parent=1 // pred_region
      %56 = vst [vmem:[#allocation2] sm:$0xff] 0.0
    $region21: #{tpu_custom_call.1} parent=1 // pred_fallthru
      _
    %v57 = vld [vmem:[#allocation3] sm:$0xff]
    %v58 = vld [vmem:[#allocation3 + $0x8] sm:$0xff]
    %v59 = vld [vmem:[#allocation6] sm:$0xff]
    %v60 = vld [vmem:[#allocation6 + $0x8] sm:$0xff]
    %v61 = vmax.f32 %v57, 0.0
    %v62 = vmax.f32 %v58, 0.0
    %v63 = vmul.f32 %v57, %v59
    %v64 = vmul.f32 %v58, %v60
    %v65 = vsub.f32 %v61, %v63
    %v66 = vsub.f32 %v62, %v64
    %v67 = vand.u32 2147483647, %v57
    %v68 = vand.u32 2147483647, %v58
    %v69 = vsub.f32 0.0, %v67
    %v70 = vsub.f32 0.0, %v68
    %v71 = vmul.f32 %v69, 1.442695
    %v72 = vpow.pop %v71
    %v73 = vmul.f32 %v70, 1.442695
    %v74 = vpow.pop %v73
    %v75 = vadd.f32 %v72, 1.0
    %v76 = vlog2.pop %v75
    %v77 = vmul.f32 %v76, 0.6931472
    %v78 = vmul.f32 -0.5, %v72
    %v79 = vadd.f32 %v78, 1.0
    %v80 = vmul.f32 %v79, %v72
    %v81 = vand.u32 2147483647, %v72
    %vm82 = vcmp.lt.f32.partialorder %v81, 0.0004427343
    %v83 = vsel %vm82, %v80, %v77
    %v84 = vadd.f32 %v74, 1.0
    %v85 = vlog2.pop %v84
    %v86 = vmul.f32 %v85, 0.6931472
    %v87 = vmul.f32 -0.5, %v74
    %v88 = vadd.f32 %v87, 1.0
    %v89 = vmul.f32 %v88, %v74
    %v90 = vand.u32 2147483647, %v74
    %vm91 = vcmp.lt.f32.partialorder %v90, 0.0004427343
    %v92 = vsel %vm91, %v89, %v86
    %v93 = vadd.f32 %v65, %v83
    %v94 = vadd.f32 %v66, %v92
    %v95 = vld [vmem:[#allocation2] sm:$0xff]
    %v96 = vadd.f32 %v93, %v94
    %v97 = vadd.f32 %v95, %v96
    %98 = vst [vmem:[#allocation2] sm:$0xff] %v97
    // Predicated region
    $region22: #{tpu_custom_call.1} parent=1 // pred_check
      %p99 = pneg %p52
    $region23: #{tpu_custom_call.1} parent=1 // pred_check_branch
      %101 = sbr.rel (%p99) target = $region25
    $region24: #{tpu_custom_call.1} parent=1 // pred_region
      %v102 = vld [vmem:[#allocation2] sm:$0xff]
      %v103 = vrot.slane %v102, 4
      %v104 = vadd.f32 %v102, %v103
      %v105 = vrot.slane %v104, 2
      %v106 = vadd.f32 %v104, %v105
      %v107 = vrot.slane %v106, 1
      %v108 = vadd.f32 %v106, %v107
      %109 = vst [vmem:[#allocation8] sm:$0x1] %v108
    $region25: #{tpu_custom_call.1} parent=1 // pred_fallthru
      _
    // Predicated region
    $region26: #{tpu_custom_call.1} parent=1 // pred_check
      _
    $region27: #{tpu_custom_call.1} parent=1 // pred_check_branch
      %111 = sbr.rel (0) target = $region29
    $region28: #{tpu_custom_call.1} parent=1 // pred_region
      %s113 = ssub.s32 16, 16
      %114 = vsyncadd [#allocation5], %s113
      %s116 = sshll.u32 [#allocation8], 4
      %s117 = int_to_ptr.vmem [resolvable:$true] %s116
      %119 = dma.vmem_to_hbm [thread:$0]  %s117, 16, %s2, [#allocation5]
    $region29: #{tpu_custom_call.1} parent=1 // pred_fallthru
      _
    // Predicated region
    $region30: #{tpu_custom_call.1} parent=1 // pred_check
      _
    $region31: #{tpu_custom_call.1} parent=1 // pred_check_branch
      %121 = sbr.rel (0) target = $region33
    $region32: #{tpu_custom_call.1} parent=1 // pred_region
      %122 = dma.done [#allocation5], 16
    $region33: #{tpu_custom_call.1} parent=1 // pred_fallthru
      _
    %123 = vsyncpa [#allocation4], 1
    %124 = vsyncpa [#allocation7], 1
    %125 = vsyncpa [#allocation5], 1

</llo_original>
